<compile_context>
chip_gen: v5e
topology: v5e:2x2
jax: 0.10.0
libtpu: 0.0.40
codegen_flags: <defaults>
</compile_context>

<pallas_src>
import functools

import jax
import jax.numpy as jnp
from jax import lax
from jax.experimental import pallas as pl
from jax.experimental.pallas import tpu as pltpu

BN_EPS = 1e-5


def _conv_stats_kernel(x_ref, w_ref, b_ref, o_ref, stats_ref, *, H, W):
    """Pass 1: per-image 3x3 conv as a single fused matmul + BN partial sums.

    x_ref:     (1, Cin, L)     H-padded, per-image row-major flattened input with one
                               extra zero on each end; L = (H+2)*W + 2; compute dtype.
    w_ref:     (Cout, 9*Cin)   3x3 weights flattened as k = (ky*3 + kx)*Cin + ci.
    b_ref:     (Cout, 1)       conv bias, f32.
    o_ref:     (1, Cout, H*W)  conv output (pre-BN), f32, lane-dense.
    stats_ref: (1, Cout, 2)    per-image [sum, sum_of_squares] over H*W, f32.
    """
    T = H * W
    x = x_ref[0]                                              # (Cin, L)

    # Column-boundary masks: taps with kx==0 are invalid at x==0 and kx==2 at x==W-1
    # (the shifted flat window would otherwise wrap into the neighbouring row).
    col = lax.broadcasted_iota(jnp.int32, (1, T), 1) % W
    not_left = col != 0
    not_right = col != (W - 1)

    taps = []
    for ky in range(3):                                       # static 3x3 unroll
        for kx in range(3):
            start = ky * W + kx
            win = x[:, start:start + T]                       # (Cin, T) shifted window
            if kx == 0:
                win = jnp.where(not_left, win, jnp.zeros_like(win))
            elif kx == 2:
                win = jnp.where(not_right, win, jnp.zeros_like(win))
            taps.append(win)
    slab = jnp.concatenate(taps, axis=0)                      # (9*Cin, T), VMEM-only im2col

    conv = jnp.dot(w_ref[...], slab,
                   preferred_element_type=jnp.float32)        # (Cout, T) one MXU matmul
    conv = conv + b_ref[...]                                  # broadcast (Cout, 1)

    o_ref[0] = conv
    s = jnp.sum(conv, axis=1, keepdims=True)                  # (Cout, 1)
    ss = jnp.sum(conv * conv, axis=1, keepdims=True)          # (Cout, 1)
    stats_ref[0] = jnp.concatenate([s, ss], axis=1)           # (Cout, 2)


def _bn_relu_kernel(y_ref, scale_ref, shift_ref, o_ref):
    """Pass 2: per-image normalize + affine + ReLU, lane-dense, all f32."""
    y = y_ref[0]                                              # (Cout, T) f32
    z = y * scale_ref[...] + shift_ref[...]                   # (Cout, 1) broadcasts
    o_ref[0] = jnp.maximum(z, 0.0)


def yellow_block_forward(x_nchw, w_oihw, bias, gamma, beta,
                         *, compute_dtype=jnp.bfloat16):
    """Pallas implementation of YellowBlock.forward.  x_nchw: (N, Cin, H, W) f32."""
    N, Cin, H, W = x_nchw.shape
    Cout = w_oihw.shape[0]
    T = H * W
    L = (H + 2) * W + 2          # H padded by 1 row each side, +1 edge element each side

    # --- layout glue: single copy of the input in HBM (no 9x im2col slab) ---
    xp = jnp.pad(x_nchw.astype(jnp.float32), ((0, 0), (0, 0), (1, 1), (0, 0)))
    x_lin = jnp.pad(xp.reshape(N, Cin, (H + 2) * W), ((0, 0), (0, 0), (1, 1)))
    x_lin = x_lin.astype(compute_dtype)                       # (N, Cin, L)

    # (Cout, 9*Cin) with k = (ky*3 + kx)*Cin + ci  -- matches tap order in the kernel.
    w_flat = (jnp.transpose(w_oihw, (0, 2, 3, 1))
              .reshape(Cout, 9 * Cin).astype(compute_dtype))
    b_col = bias.reshape(Cout, 1).astype(jnp.float32)

    conv_out, stats = pl.pallas_call(
        functools.partial(_conv_stats_kernel, H=H, W=W),
        out_shape=(jax.ShapeDtypeStruct((N, Cout, T), jnp.float32),
                   jax.ShapeDtypeStruct((N, Cout, 2), jnp.float32)),
        grid=(N,),
        in_specs=[pl.BlockSpec((1, Cin, L), lambda n: (n, 0, 0)),
                  pl.BlockSpec((Cout, 9 * Cin), lambda n: (0, 0)),
                  pl.BlockSpec((Cout, 1), lambda n: (0, 0))],
        out_specs=(pl.BlockSpec((1, Cout, T), lambda n: (n, 0, 0)),
                   pl.BlockSpec((1, Cout, 2), lambda n: (n, 0, 0))),
        compiler_params=pltpu.CompilerParams(dimension_semantics=("parallel",)),
    )(x_lin, w_flat, b_col)

    # --- tiny GLOBAL BN reduction (training-mode batch stats, biased variance), f32 ---
    count = jnp.float32(N * T)
    tot = jnp.sum(stats, axis=0)                              # (Cout, 2)
    mean = tot[:, 0] / count
    var = jnp.maximum(tot[:, 1] / count - mean * mean, 0.0)
    scale = gamma.astype(jnp.float32) * lax.rsqrt(var + BN_EPS)
    shift = beta.astype(jnp.float32) - mean * scale
    # TODO(synk): BN running-stat (momentum) updates are a training side-effect, not part
    # of the returned activation; omitted.

    out_flat = pl.pallas_call(
        _bn_relu_kernel,
        out_shape=jax.ShapeDtypeStruct((N, Cout, T), jnp.float32),
        grid=(N,),
        in_specs=[pl.BlockSpec((1, Cout, T), lambda n: (n, 0, 0)),
                  pl.BlockSpec((Cout, 1), lambda n: (0, 0)),
                  pl.BlockSpec((Cout, 1), lambda n: (0, 0))],
        out_specs=pl.BlockSpec((1, Cout, T), lambda n: (n, 0, 0)),
        compiler_params=pltpu.CompilerParams(dimension_semantics=("parallel",)),
    )(conv_out, scale.reshape(Cout, 1), shift.reshape(Cout, 1))

    return out_flat.reshape(N, Cout, H, W)      # already NCHW ordered -- no transpose


def yellow_block_reference(x_nchw, w_oihw, bias, gamma, beta):
    """Pure-JAX f32 reference matching nn.Conv2d + nn.BatchNorm2d(train) + ReLU."""
    y = lax.conv_general_dilated(
        x_nchw.astype(jnp.float32), w_oihw.astype(jnp.float32),
        window_strides=(1, 1), padding=((1, 1), (1, 1)),
        dimension_numbers=("NCHW", "OIHW", "NCHW"))
    y = y + bias.reshape(1, -1, 1, 1)
    mean = jnp.mean(y, axis=(0, 2, 3), keepdims=True)
    var = jnp.mean((y - mean) ** 2, axis=(0, 2, 3), keepdims=True)
    y = (y - mean) * lax.rsqrt(var + BN_EPS)
    y = y * gamma.reshape(1, -1, 1, 1) + beta.reshape(1, -1, 1, 1)
    return jnp.maximum(y, 0.0)


if __name__ == "__main__":
    # Small shapes consistent with the module: in_planes=4, out_planes=8.
    N, Cin, Cout, H, W = 2, 4, 8, 16, 16

    key = jax.random.PRNGKey(0)
    kx, kw, kb = jax.random.split(key, 3)

    x = jax.random.normal(kx, (N, Cin, H, W), dtype=jnp.float32)

    # Deterministic parameter init (shapes match nn.Conv2d / nn.BatchNorm2d defaults).
    fan_in = Cin * 3 * 3
    bound = 1.0 / jnp.sqrt(fan_in)
    w = jax.random.uniform(kw, (Cout, Cin, 3, 3), minval=-bound, maxval=bound,
                           dtype=jnp.float32)
    b = jax.random.uniform(kb, (Cout,), minval=-bound, maxval=bound,
                           dtype=jnp.float32)
    gamma = jnp.ones((Cout,), jnp.float32)   # BN weight init
    beta = jnp.zeros((Cout,), jnp.float32)   # BN bias init

    ref = jax.block_until_ready(yellow_block_reference(x, w, b, gamma, beta))

    # f32 MXU path: bit-tight check against the f32 reference.
    out_f32 = jax.block_until_ready(
        yellow_block_forward(x, w, b, gamma, beta, compute_dtype=jnp.float32))
    assert out_f32.shape == (N, Cout, H, W), out_f32.shape
    assert jnp.allclose(out_f32, ref, atol=1e-4, rtol=1e-4), \
        float(jnp.max(jnp.abs(out_f32 - ref)))

    # bf16 MXU inputs / f32 accumulation (recommended v6e & v7x path): same semantics up
    # to bf16 input rounding (~4e-3 relative), so compare with a correspondingly looser
    # tolerance against the f32 reference.
    out_bf16 = jax.block_until_ready(
        yellow_block_forward(x, w, b, gamma, beta, compute_dtype=jnp.bfloat16))
    assert out_bf16.shape == (N, Cout, H, W), out_bf16.shape
    assert jnp.allclose(out_bf16, ref, atol=6e-2, rtol=6e-2), \
        float(jnp.max(jnp.abs(out_bf16 - ref)))

    print("KERNEL_OK")
</pallas_src>

<mosaic_0001>
module attributes {stable_mosaic.version = 11 : i64} {
  func.func @_conv_stats_kernel(%arg0: i32, %arg1: memref<1x4x290xf32, #tpu.memory_space<vmem>>, %arg2: memref<8x36xf32, #tpu.memory_space<vmem>>, %arg3: memref<8x1xf32, #tpu.memory_space<vmem>>, %arg4: memref<1x8x256xf32, #tpu.memory_space<vmem>>, %arg5: memref<1x8x2xf32, #tpu.memory_space<vmem>>) attributes {dimension_semantics = [#tpu.dimension_semantics<parallel>], iteration_bounds = array<i64: 2>, scalar_prefetch = 0 : i64, scratch_operands = 0 : i64, tpu.core_type = #tpu.core_type<tc>, window_params = [{transform_indices = @transform_0, window_bounds = array<i64: 1, 4, 290>}, {pipeline_mode = #tpu.pipeline_mode<synchronous>, transform_indices = @transform_1, window_bounds = array<i64: 8, 36>}, {pipeline_mode = #tpu.pipeline_mode<synchronous>, transform_indices = @transform_2, window_bounds = array<i64: 8, 1>}, {transform_indices = @transform_3, window_bounds = array<i64: 1, 8, 256>}, {transform_indices = @transform_4, window_bounds = array<i64: 1, 8, 2>}]} {
    %c0 = arith.constant 0 : index
    %c0_0 = arith.constant 0 : index
    %c0_1 = arith.constant 0 : index
    %0 = vector.load %arg1[%c0, %c0_0, %c0_1] : memref<1x4x290xf32, #tpu.memory_space<vmem>>, vector<1x4x290xf32>
    %1 = vector.shape_cast %0 : vector<1x4x290xf32> to vector<4x290xf32>
    %2 = tpu.iota {dimensions = array<i32: 1>} : vector<1x256xi32>
    %c16_i32 = arith.constant 16 : i32
    %c0_i32 = arith.constant 0 : i32
    %3 = arith.cmpi eq, %c16_i32, %c0_i32 : i32
    %c1_i32 = arith.constant 1 : i32
    %4 = arith.select %3, %c1_i32, %c16_i32 : i32
    %5 = vector.broadcast %4 : i32 to vector<1x256xi32>
    %6 = arith.remsi %2, %5 : vector<1x256xi32>
    %c0_i32_2 = arith.constant 0 : i32
    %7 = vector.broadcast %c0_i32_2 : i32 to vector<1x256xi32>
    %8 = arith.cmpi ne, %6, %7 : vector<1x256xi32>
    %c0_i32_3 = arith.constant 0 : i32
    %9 = vector.broadcast %c0_i32_3 : i32 to vector<1x256xi32>
    %10 = arith.cmpi slt, %6, %9 : vector<1x256xi32>
    %c0_i32_4 = arith.constant 0 : i32
    %11 = arith.cmpi slt, %4, %c0_i32_4 : i32
    %12 = vector.broadcast %11 : i1 to vector<1x256xi1>
    %13 = vector.broadcast %12 : vector<1x256xi1> to vector<1x256xi1>
    %14 = arith.xori %10, %13 : vector<1x256xi1>
    %15 = arith.andi %14, %8 : vector<1x256xi1>
    %16 = vector.broadcast %4 : i32 to vector<1x256xi32>
    %17 = arith.addi %6, %16 : vector<1x256xi32>
    %18 = arith.select %15, %17, %6 : vector<1x256xi1>, vector<1x256xi32>
    %c0_i32_5 = arith.constant 0 : i32
    %19 = vector.broadcast %c0_i32_5 : i32 to vector<1x256xi32>
    %20 = arith.cmpi ne, %18, %19 : vector<1x256xi32>
    %c15_i32 = arith.constant 15 : i32
    %21 = vector.broadcast %c15_i32 : i32 to vector<1x256xi32>
    %22 = arith.cmpi ne, %18, %21 : vector<1x256xi32>
    %23 = vector.extract_strided_slice %1 {offsets = [0, 0], sizes = [4, 256], strides = [1, 1]} : vector<4x290xf32> to vector<4x256xf32>
    %cst = arith.constant 0.000000e+00 : f32
    %24 = vector.broadcast %cst : f32 to vector<4x256xf32>
    %25 = vector.shape_cast %20 : vector<1x256xi1> to vector<1x256xi1>
    %26 = vector.broadcast %25 : vector<1x256xi1> to vector<4x256xi1>
    %27 = arith.select %26, %23, %24 : vector<4x256xi1>, vector<4x256xf32>
    %28 = vector.extract_strided_slice %1 {offsets = [0, 1], sizes = [4, 256], strides = [1, 1]} : vector<4x290xf32> to vector<4x256xf32>
    %29 = vector.extract_strided_slice %1 {offsets = [0, 2], sizes = [4, 256], strides = [1, 1]} : vector<4x290xf32> to vector<4x256xf32>
    %cst_6 = arith.constant 0.000000e+00 : f32
    %30 = vector.broadcast %cst_6 : f32 to vector<4x256xf32>
    %31 = vector.shape_cast %22 : vector<1x256xi1> to vector<1x256xi1>
    %32 = vector.broadcast %31 : vector<1x256xi1> to vector<4x256xi1>
    %33 = arith.select %32, %29, %30 : vector<4x256xi1>, vector<4x256xf32>
    %34 = vector.extract_strided_slice %1 {offsets = [0, 16], sizes = [4, 256], strides = [1, 1]} : vector<4x290xf32> to vector<4x256xf32>
    %cst_7 = arith.constant 0.000000e+00 : f32
    %35 = vector.broadcast %cst_7 : f32 to vector<4x256xf32>
    %36 = vector.shape_cast %20 : vector<1x256xi1> to vector<1x256xi1>
    %37 = vector.broadcast %36 : vector<1x256xi1> to vector<4x256xi1>
    %38 = arith.select %37, %34, %35 : vector<4x256xi1>, vector<4x256xf32>
    %39 = vector.extract_strided_slice %1 {offsets = [0, 17], sizes = [4, 256], strides = [1, 1]} : vector<4x290xf32> to vector<4x256xf32>
    %40 = vector.extract_strided_slice %1 {offsets = [0, 18], sizes = [4, 256], strides = [1, 1]} : vector<4x290xf32> to vector<4x256xf32>
    %cst_8 = arith.constant 0.000000e+00 : f32
    %41 = vector.broadcast %cst_8 : f32 to vector<4x256xf32>
    %42 = vector.shape_cast %22 : vector<1x256xi1> to vector<1x256xi1>
    %43 = vector.broadcast %42 : vector<1x256xi1> to vector<4x256xi1>
    %44 = arith.select %43, %40, %41 : vector<4x256xi1>, vector<4x256xf32>
    %45 = vector.extract_strided_slice %1 {offsets = [0, 32], sizes = [4, 256], strides = [1, 1]} : vector<4x290xf32> to vector<4x256xf32>
    %cst_9 = arith.constant 0.000000e+00 : f32
    %46 = vector.broadcast %cst_9 : f32 to vector<4x256xf32>
    %47 = vector.shape_cast %20 : vector<1x256xi1> to vector<1x256xi1>
    %48 = vector.broadcast %47 : vector<1x256xi1> to vector<4x256xi1>
    %49 = arith.select %48, %45, %46 : vector<4x256xi1>, vector<4x256xf32>
    %50 = vector.extract_strided_slice %1 {offsets = [0, 33], sizes = [4, 256], strides = [1, 1]} : vector<4x290xf32> to vector<4x256xf32>
    %51 = vector.extract_strided_slice %1 {offsets = [0, 34], sizes = [4, 256], strides = [1, 1]} : vector<4x290xf32> to vector<4x256xf32>
    %cst_10 = arith.constant 0.000000e+00 : f32
    %52 = vector.broadcast %cst_10 : f32 to vector<4x256xf32>
    %53 = vector.shape_cast %22 : vector<1x256xi1> to vector<1x256xi1>
    %54 = vector.broadcast %53 : vector<1x256xi1> to vector<4x256xi1>
    %55 = arith.select %54, %51, %52 : vector<4x256xi1>, vector<4x256xf32>
    %56 = tpu.concatenate %27, %28, %33, %38, %39, %44, %49, %50, %55 in 0 : vector<4x256xf32>, vector<4x256xf32>, vector<4x256xf32>, vector<4x256xf32>, vector<4x256xf32>, vector<4x256xf32>, vector<4x256xf32>, vector<4x256xf32>, vector<4x256xf32> -> vector<36x256xf32>
    %c0_11 = arith.constant 0 : index
    %c0_12 = arith.constant 0 : index
    %57 = vector.load %arg2[%c0_11, %c0_12] : memref<8x36xf32, #tpu.memory_space<vmem>>, vector<8x36xf32>
    %cst_13 = arith.constant dense<0.000000e+00> : vector<8x256xf32>
    %58 = tpu.matmul %57, %56, %cst_13 {dimension_numbers = #tpu.dot_dimension_numbers<[1], [0], [0], [1], [0, 0, 1, 1], [], []>} : vector<8x36xf32>, vector<36x256xf32>, vector<8x256xf32> -> vector<8x256xf32>
    %c0_14 = arith.constant 0 : index
    %c0_15 = arith.constant 0 : index
    %59 = vector.load %arg3[%c0_14, %c0_15] : memref<8x1xf32, #tpu.memory_space<vmem>>, vector<8x1xf32>
    %60 = vector.broadcast %59 : vector<8x1xf32> to vector<8x256xf32>
    %61 = arith.addf %58, %60 : vector<8x256xf32>
    %c0_16 = arith.constant 0 : index
    %c0_17 = arith.constant 0 : index
    %c0_18 = arith.constant 0 : index
    %62 = vector.load %arg4[%c0_16, %c0_17, %c0_18] : memref<1x8x256xf32, #tpu.memory_space<vmem>>, vector<1x8x256xf32>
    %63 = vector.shape_cast %62 : vector<1x8x256xf32> to vector<8x256xf32>
    %64 = vector.shape_cast %61 : vector<8x256xf32> to vector<1x8x256xf32>
    tpu.vector_store %arg4[%c0_16, %c0_17, %c0_18], %64 {strides = array<i32>} : memref<1x8x256xf32, #tpu.memory_space<vmem>>, vector<1x8x256xf32>,
    %cst_19 = arith.constant dense<0.000000e+00> : vector<8xf32>
    %65 = vector.multi_reduction <add>, %61, %cst_19 [1] : vector<8x256xf32> to vector<8xf32>
    %66 = vector.shape_cast %65 : vector<8xf32> to vector<8x1xf32>
    %67 = arith.mulf %61, %61 : vector<8x256xf32>
    %cst_20 = arith.constant dense<0.000000e+00> : vector<8xf32>
    %68 = vector.multi_reduction <add>, %67, %cst_20 [1] : vector<8x256xf32> to vector<8xf32>
    %69 = vector.shape_cast %68 : vector<8xf32> to vector<8x1xf32>
    %70 = tpu.concatenate %66, %69 in 1 : vector<8x1xf32>, vector<8x1xf32> -> vector<8x2xf32>
    %c0_21 = arith.constant 0 : index
    %c0_22 = arith.constant 0 : index
    %c0_23 = arith.constant 0 : index
    %71 = vector.load %arg5[%c0_21, %c0_22, %c0_23] : memref<1x8x2xf32, #tpu.memory_space<vmem>>, vector<1x8x2xf32>
    %72 = vector.shape_cast %71 : vector<1x8x2xf32> to vector<8x2xf32>
    %73 = vector.shape_cast %70 : vector<8x2xf32> to vector<1x8x2xf32>
    tpu.vector_store %arg5[%c0_21, %c0_22, %c0_23], %73 {strides = array<i32>} : memref<1x8x2xf32, #tpu.memory_space<vmem>>, vector<1x8x2xf32>,
    return
  }
  func.func @transform_0(%arg0: i32) -> (i32, i32, i32) {
    %c0_i32 = arith.constant 0 : i32
    %c0_i32_0 = arith.constant 0 : i32
    %c0_i32_1 = arith.constant 0 : i32
    return %arg0, %c0_i32, %c0_i32_0 : i32, i32, i32
  }
  func.func @transform_1(%arg0: i32) -> (i32, i32) {
    %c0_i32 = arith.constant 0 : i32
    %c0_i32_0 = arith.constant 0 : i32
    %c0_i32_1 = arith.constant 0 : i32
    return %c0_i32, %c0_i32_0 : i32, i32
  }
  func.func @transform_2(%arg0: i32) -> (i32, i32) {
    %c0_i32 = arith.constant 0 : i32
    %c0_i32_0 = arith.constant 0 : i32
    %c0_i32_1 = arith.constant 0 : i32
    return %c0_i32, %c0_i32_0 : i32, i32
  }
  func.func @transform_3(%arg0: i32) -> (i32, i32, i32) {
    %c0_i32 = arith.constant 0 : i32
    %c0_i32_0 = arith.constant 0 : i32
    %c0_i32_1 = arith.constant 0 : i32
    return %arg0, %c0_i32, %c0_i32_0 : i32, i32, i32
  }
  func.func @transform_4(%arg0: i32) -> (i32, i32, i32) {
    %c0_i32 = arith.constant 0 : i32
    %c0_i32_0 = arith.constant 0 : i32
    %c0_i32_1 = arith.constant 0 : i32
    return %arg0, %c0_i32, %c0_i32_0 : i32, i32, i32
  }
}

</mosaic_0001>

<llo_original>
// kernel: tpu_custom_call.1
$region0: #{tpu_custom_call.1}
  #allocation0 [shape = 'u32[]', space=smem, size = 0x4, offset = 0x4, fixed_abs, tag = 'smem constant byte address 0x4 - core index']
  #allocation1 [shape = 'u32[72,128]{1,0:T(1,128)}', space=vmem, size = 0x9000, scoped, tag = 'internal scratch']
  %s0 = inlined_call_operand.hbm [shape: f32[2,4,290], index: 0, kind: input, shape index: {}]
  %s1 = inlined_call_operand.vmem [shape: f32[8,36], index: 1, kind: input, shape index: {}]
  %s2 = inlined_call_operand.vmem [shape: f32[8,1], index: 2, kind: input, shape index: {}]
  %s3 = inlined_call_operand.hbm [shape: f32[2,8,256], index: 3, kind: output, shape index: {0}]
  %s4 = inlined_call_operand.vmem [shape: f32[2,8,2], index: 4, kind: output, shape index: {1}]
  %5 = xla_tuple %s3, %s4
  %s6 = sld [smem:[#allocation0]]
  $region57: #{tpu_custom_call.1} parent=0
    _
  %s8 = ssub.s32 1, %s6
  %s9 = scalar_select 0, %s8, %s6
  $region1: #{tpu_custom_call.1} parent=0
    #allocation2 [shape = 'u8[12288]{0}', space=vmem, size = 0x3000, scoped, tag = 'input window, operand 0']
    #allocation3 [shape = 's32[2]{0}', space=sflag, size = 0x8, scoped, tag = 'scoped memory for tpu_custom_call.1']
    #allocation4 [shape = 's32[2]{0}', space=sflag, size = 0x8, scoped, tag = 'scoped memory for tpu_custom_call.1']
    #allocation5 [shape = 'u8[16384]{0}', space=vmem, size = 0x4000, scoped, tag = 'output window, operand 0']
    %10 = vsyncpa [#allocation3], 0
    %s11 = scalar_lea.sflag [#allocation3], 1
    %12 = vsyncpa %s11, 0
    %13 = vsyncpa [#allocation4], 0
    %s14 = scalar_lea.sflag [#allocation4], 1
    %15 = vsyncpa %s14, 0
    loop: start=0, step=1, limit=4
    $region2: #{tpu_custom_call.1} parent=1 // loop_pre_header
      _
    $region3: #{tpu_custom_call.1} parent=1 // loop_header
      %s17 = sphi 0, %s21
      %p18 = scmp.ge.s32.totalorder %s17, 4
      %s27 = sphi 0, %s29
      %s30 = sphi 0, %s27
      %s31 = sphi 0, %s30
      %s47 = sphi 0, %s31
      %s51 = sphi 0, %s51
      %s53 = sphi 0, %s51
      %s54 = sphi 0, %s53
      %s68 = sphi 0, %s54
      %s72 = sphi 0, %s72
      %s74 = sphi 0, %s72
      %s75 = sphi 0, %s74
      %s89 = sphi 0, %s75
      %s95 = sphi 0, %s97
      %s98 = sphi 0, %s95
      %s99 = sphi 0, %s98
      %s115 = sphi 0, %s99
      %s121 = sphi 0, %s123
      %s124 = sphi 0, %s121
      %s125 = sphi 0, %s124
      %s141 = sphi 0, %s125
    $region4: #{tpu_custom_call.1} parent=1 // loop_header_branch
      %20 = sbr.rel (%p18) target = $region8
    $region5: #{tpu_custom_call.1} parent=1 // loop_body
      %s22 = ssub.s32 %s17, 1
      %s23 = ssub.s32 %s17, 2
      %s24 = sadd.s32 %s17, 1
      %s25 = ssub.s32 %s17, %s24
      %p26 = scmp.eq.s32.totalorder %s25, 0
      %s28 = sadd.s32 %s27, 1
      %s29 = scalar_select %p26, %s27, %s28
      %p32 = pneg %p26
      %p33 = scmp.eq.s32.totalorder %s17, 1
      %p34 = por %p32, %p33
      %p35 = scmp.ne.s32.totalorder %s27, %s30
      %p36 = scmp.eq.s32.totalorder %s17, 0
      %p37 = por %p35, %p36
      %p38 = scmp.ne.s32.totalorder %s27, %s30
      %p39 = scmp.eq.s32.totalorder %s22, 1
      %p40 = por %p38, %p39
      %p41 = scmp.ne.s32.totalorder %s30, %s31
      %p42 = scmp.eq.s32.totalorder %s22, 0
      %p43 = por %p41, %p42
      %p44 = scmp.ne.s32.totalorder %s30, %s31
      %p45 = scmp.eq.s32.totalorder %s23, 1
      %p46 = por %p44, %p45
      %p48 = scmp.ne.s32.totalorder %s31, %s47
      %p49 = scmp.eq.s32.totalorder %s23, 0
      %p50 = por %p48, %p49
      %s52 = sadd.s32 %s51, 1
      %p55 = scmp.eq.s32.totalorder %s17, 1
      %p56 = scmp.ne.s32.totalorder %s51, %s53
      %p57 = scmp.eq.s32.totalorder %s17, 0
      %p58 = por %p56, %p57
      %p59 = scmp.ne.s32.totalorder %s51, %s53
      %p60 = scmp.eq.s32.totalorder %s22, 1
      %p61 = por %p59, %p60
      %p62 = scmp.ne.s32.totalorder %s53, %s54
      %p63 = scmp.eq.s32.totalorder %s22, 0
      %p64 = por %p62, %p63
      %p65 = scmp.ne.s32.totalorder %s53, %s54
      %p66 = scmp.eq.s32.totalorder %s23, 1
      %p67 = por %p65, %p66
      %p69 = scmp.ne.s32.totalorder %s54, %s68
      %p70 = scmp.eq.s32.totalorder %s23, 0
      %p71 = por %p69, %p70
      %s73 = sadd.s32 %s72, 1
      %p76 = scmp.eq.s32.totalorder %s17, 1
      %p77 = scmp.ne.s32.totalorder %s72, %s74
      %p78 = scmp.eq.s32.totalorder %s17, 0
      %p79 = por %p77, %p78
      %p80 = scmp.ne.s32.totalorder %s72, %s74
      %p81 = scmp.eq.s32.totalorder %s22, 1
      %p82 = por %p80, %p81
      %p83 = scmp.ne.s32.totalorder %s74, %s75
      %p84 = scmp.eq.s32.totalorder %s22, 0
      %p85 = por %p83, %p84
      %p86 = scmp.ne.s32.totalorder %s74, %s75
      %p87 = scmp.eq.s32.totalorder %s23, 1
      %p88 = por %p86, %p87
      %p90 = scmp.ne.s32.totalorder %s75, %s89
      %p91 = scmp.eq.s32.totalorder %s23, 0
      %p92 = por %p90, %p91
      %s93 = ssub.s32 %s17, %s24
      %p94 = scmp.eq.s32.totalorder %s93, 0
      %s96 = sadd.s32 %s95, 1
      %s97 = scalar_select %p94, %s95, %s96
      %p100 = pneg %p94
      %p101 = scmp.eq.s32.totalorder %s17, 1
      %p102 = por %p100, %p101
      %p103 = scmp.ne.s32.totalorder %s95, %s98
      %p104 = scmp.eq.s32.totalorder %s17, 0
      %p105 = por %p103, %p104
      %p106 = scmp.ne.s32.totalorder %s95, %s98
      %p107 = scmp.eq.s32.totalorder %s22, 1
      %p108 = por %p106, %p107
      %p109 = scmp.ne.s32.totalorder %s98, %s99
      %p110 = scmp.eq.s32.totalorder %s22, 0
      %p111 = por %p109, %p110
      %p112 = scmp.ne.s32.totalorder %s98, %s99
      %p113 = scmp.eq.s32.totalorder %s23, 1
      %p114 = por %p112, %p113
      %p116 = scmp.ne.s32.totalorder %s99, %s115
      %p117 = scmp.eq.s32.totalorder %s23, 0
      %p118 = por %p116, %p117
      %s119 = ssub.s32 %s17, %s24
      %p120 = scmp.eq.s32.totalorder %s119, 0
      %s122 = sadd.s32 %s121, 1
      %s123 = scalar_select %p120, %s121, %s122
      %p126 = pneg %p120
      %p127 = scmp.eq.s32.totalorder %s17, 1
      %p128 = por %p126, %p127
      %p129 = scmp.ne.s32.totalorder %s121, %s124
      %p130 = scmp.eq.s32.totalorder %s17, 0
      %p131 = por %p129, %p130
      %p132 = scmp.ne.s32.totalorder %s121, %s124
      %p133 = scmp.eq.s32.totalorder %s22, 1
      %p134 = por %p132, %p133
      %p135 = scmp.ne.s32.totalorder %s124, %s125
      %p136 = scmp.eq.s32.totalorder %s22, 0
      %p137 = por %p135, %p136
      %p138 = scmp.ne.s32.totalorder %s124, %s125
      %p139 = scmp.eq.s32.totalorder %s23, 1
      %p140 = por %p138, %p139
      %p142 = scmp.ne.s32.totalorder %s125, %s141
      %p143 = scmp.eq.s32.totalorder %s23, 0
      %p144 = por %p142, %p143
      %p145 = scmp.le.s32.totalorder 1, %s17
      %p146 = scmp.lt.s32.totalorder %s17, 3
      %p147 = pnand %p145, %p146
      %p148 = pneg %p147
      // Predicated region
      $region9: #{tpu_custom_call.1} parent=5 // pred_check
        _
      $region10: #{tpu_custom_call.1} parent=5 // pred_check_branch
        %150 = sbr.rel (%p147) target = $region12
      $region11: #{tpu_custom_call.1} parent=5 // pred_region
        %s151 = ssub.s32 %s17, 1
        // Predicated region
        $region13: #{tpu_custom_call.1} parent=11 // pred_check
          %p152 = pneg %p64
        $region14: #{tpu_custom_call.1} parent=11 // pred_check_branch
          %154 = sbr.rel (%p152) target = $region16
        $region15: #{tpu_custom_call.1} parent=11 // pred_region
          _
        $region16: #{tpu_custom_call.1} parent=11 // pred_fallthru
          _
        // Predicated region
        $region17: #{tpu_custom_call.1} parent=11 // pred_check
          %p155 = pneg %p85
        $region18: #{tpu_custom_call.1} parent=11 // pred_check_branch
          %157 = sbr.rel (%p155) target = $region20
        $region19: #{tpu_custom_call.1} parent=11 // pred_region
          _
        $region20: #{tpu_custom_call.1} parent=11 // pred_fallthru
          _
      $region12: #{tpu_custom_call.1} parent=5 // pred_fallthru
        _
      %p158 = scmp.lt.s32.totalorder %s17, 2
      // Predicated region
      $region21: #{tpu_custom_call.1} parent=5 // pred_check
        %p159 = pneg %p158
      $region22: #{tpu_custom_call.1} parent=5 // pred_check_branch
        %161 = sbr.rel (%p159) target = $region24
      $region23: #{tpu_custom_call.1} parent=5 // pred_region
        // Predicated region
        $region25: #{tpu_custom_call.1} parent=23 // pred_check
          %p162 = pneg %p37
        $region26: #{tpu_custom_call.1} parent=23 // pred_check_branch
          %164 = sbr.rel (%p162) target = $region28
        $region27: #{tpu_custom_call.1} parent=23 // pred_region
          %s165 = sand.u32 %s27, 1
          %s166 = scalar_lea.sflag [#allocation3], %s165
          %s167 = sand.u32 %s27, 1
          %s168 = smul.addr %s167, 12
          %s169 = scalar_lea.vmem [#allocation2], %s168
          %171 = vsyncadd %s166, 0
          %s172 = smul.addr %s17, 3
          %s173 = smul.addr %s172, 4
          %s174 = scalar_lea.hbm %s0, %s173
          %s176 = sshll.u32 %s174, 4
          %s177 = int_to_ptr.hbm [resolvable:$true] %s176
          %s178 = sshll.u32 %s169, 4
          %s179 = int_to_ptr.vmem [resolvable:$true] %s178
          %181 = dma.hbm_to_vmem [thread:$0]  %s177, 192, %s179, %s166
        $region28: #{tpu_custom_call.1} parent=23 // pred_fallthru
          _
      $region24: #{tpu_custom_call.1} parent=5 // pred_fallthru
        _
      %p182 = scmp.le.s32.totalorder 1, %s17
      %p183 = scmp.lt.s32.totalorder %s17, 3
      %p184 = pnand %p182, %p183
      %p185 = pneg %p184
      // Predicated region
      $region29: #{tpu_custom_call.1} parent=5 // pred_check
        _
      $region30: #{tpu_custom_call.1} parent=5 // pred_check_branch
        %187 = sbr.rel (%p184) target = $region32
      $region31: #{tpu_custom_call.1} parent=5 // pred_region
        %s188 = ssub.s32 %s17, 1
        %s189 = sand.u32 %s30, 1
        %s190 = scalar_lea.sflag [#allocation3], %s189
        %s191 = sand.u32 %s30, 1
        %s192 = smul.addr %s191, 12
        %s193 = scalar_lea.vmem [#allocation2], %s192
        // Predicated region
        $region33: #{tpu_custom_call.1} parent=31 // pred_check
          %p194 = pneg %p43
        $region34: #{tpu_custom_call.1} parent=31 // pred_check_branch
          %196 = sbr.rel (%p194) target = $region36
        $region35: #{tpu_custom_call.1} parent=31 // pred_region
          %198 = dma.done %s190, 192
        $region36: #{tpu_custom_call.1} parent=31 // pred_fallthru
          _
        %s199 = sand.u32 %s30, 1
        %s200 = scalar_lea.sflag [#allocation3], %s199
        %s201 = sand.u32 %s30, 1
        %s202 = smul.addr %s201, 12
        %s203 = scalar_lea.vmem [#allocation2], %s202
        %p204 = pneg %p43
        %p205 = pneg %p40
        %p206 = pneg %p64
        %p207 = pneg %p61
        %p208 = pneg %p85
        %p209 = pneg %p82
        %p210 = pneg %p111
        %p211 = pneg %p108
        %s212 = sand.u32 %s98, 1
        %s213 = scalar_lea.sflag [#allocation4], %s212
        %s214 = sand.u32 %s98, 1
        %s215 = smul.addr %s214, 16
        %s216 = scalar_lea.vmem [#allocation5], %s215
        %p217 = pneg %p137
        %p218 = pneg %p134
        %p219 = scmp.lt.s32.totalorder %s22, 1
        %s220 = scalar_select %p219, %s22, 1
        %s221 = smul.addr %s220, 8
        %s222 = scalar_lea.vmem %s4, %s221
        %p223 = scmp.lt.s32.totalorder %s22, 1
        %s224 = scalar_select %p223, %s22, 1
        %s225 = smul.addr %s224, 8
        %s226 = scalar_lea.vmem %s4, %s225
        %v227 = vld [vmem:[%s193] sm:$0xff]
        %v228 = vld [vmem:[%s193 + $0x8] sm:$0xf]
        %v229 = vlaneseq
        %v230 = vand.u32 %v229, 127
        %v231 = vadd.s32 %v230, 128
        %vm232 = vcmp.lt.s32.totalorder %v230, 0
        %v233 = vsub.s32 0, %v230
        %v234 = vsel %vm232, %v233, %v230
        %v235 = vshrl.u32 %v234, 4
        %v236 = vand.u32 %v234, 15
        %v237 = vsub.s32 0, %v236
        %v238 = vsel %vm232, %v237, %v236
        %vm239 = vcmp.lt.s32.totalorder %v231, 0
        %v240 = vsub.s32 0, %v231
        %v241 = vsel %vm239, %v240, %v231
        %v242 = vshrl.u32 %v241, 4
        %v243 = vand.u32 %v241, 15
        %v244 = vsub.s32 0, %v243
        %v245 = vsel %vm239, %v244, %v243
        %vm246 = vcmp.ne.s32.totalorder %v238, 0
        %vm247 = vcmp.ne.s32.totalorder %v245, 0
        %vm248 = vcmp.lt.s32.totalorder %v238, 0
        %vm249 = vcmp.lt.s32.totalorder %v245, 0
        %vm250 = vmand %vm248, %vm246
        %vm251 = vmand %vm249, %vm247
        %v252 = vadd.s32 %v238, 16
        %v253 = vadd.s32 %v245, 16
        %v254 = vsel %vm250, %v252, %v238
        %v255 = vsel %vm251, %v253, %v245
        %vm256 = vcmp.ne.s32.totalorder %v254, 0
        %vm257 = vcmp.ne.s32.totalorder %v255, 0
        %vm258 = vcmp.ne.s32.totalorder %v254, 15
        %vm259 = vcmp.ne.s32.totalorder %v255, 15
        %v260 = vsel %vm256, 1, 0
        %v261 = vsel %vm257, 1, 0
        %vm262 = vcmp.eq.s32.totalorder %v260, 1
        %vm263 = vcmp.eq.s32.totalorder %v261, 1
        %265 = vst [vmem:[#allocation1] ss:$2 sm:$0xff] %v227
        %v266 = vld.sshfl [vmem:[#allocation1] sm:$0xff pattern:$0x75316420]
        %v267 = vld.sshfl [vmem:[#allocation1 + $0x8] sm:$0xff pattern:$0x75316420]
        %v270 = vsel %vm262, %v266, 0.0
        %v271 = vsel %vm263, %v267, 0.0
        %v272 = vsel %vm258, 1, 0
        %v273 = vsel %vm259, 1, 0
        %vm274 = vcmp.eq.s32.totalorder %v272, 1
        %vm275 = vcmp.eq.s32.totalorder %v273, 1
        %277 = vst [vmem:[#allocation1] ss:$2 sm:$0xff] %v227
        %s278 = scalar_lea.vmem [#allocation1], 16
        %279 = vst [vmem:[%s278] ss:$2 sm:$0xff] %v228
        %v280 = vld.sshfl [vmem:[#allocation1] sm:$0xff pattern:$0x75316420]
        %v281 = vld.sshfl [vmem:[#allocation1 + $0x8] sm:$0xff pattern:$0x75316420]
        %v282 = vld.sshfl [vmem:[#allocation1 + $0x10] sm:$0xff pattern:$0x75316420]
        %283 = vrot.lane.b32.xlu0 %v280, 126
        %v284 = vpop.permute.xlu0 %283
        %285 = vrot.lane.b32.xlu0 %v281, 126
        %v286 = vpop.permute.xlu0 %285
        %287 = vrot.lane.b32.xlu0 %v282, 126
        %v288 = vpop.permute.xlu0 %287
        %vm289 = vcmask 1031168
        %v290 = vsel %vm289, %v284, %v286
        %v291 = vsel %vm289, %v286, %v288
        %v294 = vsel %vm274, %v290, 0.0
        %v295 = vsel %vm275, %v291, 0.0
        %296 = vst [vmem:[#allocation1] ss:$2 sm:$0xff] %v227
        %s297 = scalar_lea.vmem [#allocation1], 16
        %298 = vst [vmem:[%s297] ss:$2 sm:$0xff] %v228
        %v299 = vld.sshfl [vmem:[#allocation1] sm:$0xff pattern:$0x75316420]
        %v300 = vld.sshfl [vmem:[#allocation1 + $0x8] sm:$0xff pattern:$0x75316420]
        %v301 = vld.sshfl [vmem:[#allocation1 + $0x10] sm:$0xff pattern:$0x75316420]
        %302 = vrot.lane.b32.xlu0 %v299, 112
        %v303 = vpop.permute.xlu0 %302
        %304 = vrot.lane.b32.xlu0 %v300, 112
        %v305 = vpop.permute.xlu0 %304
        %306 = vrot.lane.b32.xlu0 %v301, 112
        %v307 = vpop.permute.xlu0 %306
        %vm308 = vcmask 916480
        %v309 = vsel %vm308, %v303, %v305
        %v310 = vsel %vm308, %v305, %v307
        %v313 = vsel %vm262, %v309, 0.0
        %v314 = vsel %vm263, %v310, 0.0
        %315 = vst [vmem:[#allocation1] ss:$2 sm:$0xff] %v227
        %s316 = scalar_lea.vmem [#allocation1], 16
        %317 = vst [vmem:[%s316] ss:$2 sm:$0xff] %v228
        %v318 = vld.sshfl [vmem:[#allocation1] sm:$0xff pattern:$0x75316420]
        %v319 = vld.sshfl [vmem:[#allocation1 + $0x8] sm:$0xff pattern:$0x75316420]
        %v320 = vld.sshfl [vmem:[#allocation1 + $0x10] sm:$0xff pattern:$0x75316420]
        %321 = vrot.lane.b32.xlu0 %v318, 110
        %v322 = vpop.permute.xlu0 %321
        %323 = vrot.lane.b32.xlu0 %v319, 110
        %v324 = vpop.permute.xlu0 %323
        %325 = vrot.lane.b32.xlu0 %v320, 110
        %v326 = vpop.permute.xlu0 %325
        %vm327 = vcmask 900096
        %v328 = vsel %vm327, %v322, %v324
        %v329 = vsel %vm327, %v324, %v326
        %v332 = vsel %vm274, %v328, 0.0
        %v333 = vsel %vm275, %v329, 0.0
        %334 = vst [vmem:[#allocation1] ss:$2 sm:$0xff] %v227
        %s335 = scalar_lea.vmem [#allocation1], 16
        %336 = vst [vmem:[%s335] ss:$2 sm:$0xff] %v228
        %v337 = vld.sshfl [vmem:[#allocation1] sm:$0xff pattern:$0x75316420]
        %v338 = vld.sshfl [vmem:[#allocation1 + $0x8] sm:$0xff pattern:$0x75316420]
        %v339 = vld.sshfl [vmem:[#allocation1 + $0x10] sm:$0xff pattern:$0x75316420]
        %340 = vrot.lane.b32.xlu0 %v337, 96
        %v341 = vpop.permute.xlu0 %340
        %342 = vrot.lane.b32.xlu0 %v338, 96
        %v343 = vpop.permute.xlu0 %342
        %344 = vrot.lane.b32.xlu0 %v339, 96
        %v345 = vpop.permute.xlu0 %344
        %vm346 = vcmask 785408
        %v347 = vsel %vm346, %v341, %v343
        %v348 = vsel %vm346, %v343, %v345
        %v351 = vsel %vm262, %v347, 0.0
        %v352 = vsel %vm263, %v348, 0.0
        %353 = vst [vmem:[#allocation1] ss:$2 sm:$0xff] %v227
        %s354 = scalar_lea.vmem [#allocation1], 16
        %355 = vst [vmem:[%s354] ss:$2 sm:$0xff] %v228
        %v356 = vld.sshfl [vmem:[#allocation1] sm:$0xff pattern:$0x75316420]
        %v357 = vld.sshfl [vmem:[#allocation1 + $0x8] sm:$0xff pattern:$0x75316420]
        %v358 = vld.sshfl [vmem:[#allocation1 + $0x10] sm:$0xff pattern:$0x75316420]
        %359 = vrot.lane.b32.xlu0 %v356, 94
        %v360 = vpop.permute.xlu0 %359
        %361 = vrot.lane.b32.xlu0 %v357, 94
        %v362 = vpop.permute.xlu0 %361
        %363 = vrot.lane.b32.xlu0 %v358, 94
        %v364 = vpop.permute.xlu0 %363
        %vm365 = vcmask 769024
        %v366 = vsel %vm365, %v360, %v362
        %v367 = vsel %vm365, %v362, %v364
        %v370 = vsel %vm274, %v366, 0.0
        %v371 = vsel %vm275, %v367, 0.0
        %s372 = scalar_lea.vmem [#allocation1], 1
        %373 = vst [vmem:[%s372] ss:$2 sm:$0xff] %v227
        %s374 = scalar_lea.vmem [#allocation1], 17
        %375 = vst [vmem:[%s374] ss:$2 sm:$0xff] %v228
        %v376 = vld.sshfl [vmem:[#allocation1] sm:$0xff pattern:$0x75316420]
        %v377 = vld.sshfl [vmem:[#allocation1 + $0x8] sm:$0xff pattern:$0x75316420]
        %v378 = vld.sshfl [vmem:[#allocation1 + $0x10] sm:$0xff pattern:$0x75316420]
        %379 = vrot.lane.b32.xlu0 %v376, 127
        %v380 = vpop.permute.xlu0 %379
        %381 = vrot.lane.b32.xlu0 %v377, 127
        %v382 = vpop.permute.xlu0 %381
        %383 = vrot.lane.b32.xlu0 %v378, 127
        %v384 = vpop.permute.xlu0 %383
        %vm385 = vcmask 1039360
        %v386 = vsel %vm385, %v380, %v382
        %v387 = vsel %vm385, %v382, %v384
        %v392 = vrot.slane %v313, 4
        %v393 = vrot.slane %v314, 4
        %396 = vst [vmem:[#allocation1] ss:$2 sm:$0xff] %v227
        %s397 = scalar_lea.vmem [#allocation1], 16
        %398 = vst [vmem:[%s397] ss:$2 sm:$0xff] %v228
        %v399 = vld.sshfl [vmem:[#allocation1] sm:$0xff pattern:$0x75316420]
        %v400 = vld.sshfl [vmem:[#allocation1 + $0x8] sm:$0xff pattern:$0x75316420]
        %v401 = vld.sshfl [vmem:[#allocation1 + $0x10] sm:$0xff pattern:$0x75316420]
        %402 = vrot.lane.b32.xlu0 %v399, 111
        %v403 = vpop.permute.xlu0 %402
        %404 = vrot.lane.b32.xlu0 %v400, 111
        %v405 = vpop.permute.xlu0 %404
        %406 = vrot.lane.b32.xlu0 %v401, 111
        %v407 = vpop.permute.xlu0 %406
        %vm408 = vcmask 908288
        %v409 = vsel %vm408, %v403, %v405
        %v410 = vsel %vm408, %v405, %v407
        %v415 = vrot.slane %v332, 4
        %v416 = vrot.slane %v333, 4
        %s419 = scalar_lea.vmem [#allocation1], 1
        %420 = vst [vmem:[%s419] ss:$2 sm:$0xff] %v227
        %s421 = scalar_lea.vmem [#allocation1], 17
        %422 = vst [vmem:[%s421] ss:$2 sm:$0xff] %v228
        %v423 = vld.sshfl [vmem:[#allocation1] sm:$0xff pattern:$0x75316420]
        %v424 = vld.sshfl [vmem:[#allocation1 + $0x8] sm:$0xff pattern:$0x75316420]
        %v425 = vld.sshfl [vmem:[#allocation1 + $0x10] sm:$0xff pattern:$0x75316420]
        %426 = vrot.lane.b32.xlu0 %v423, 95
        %v427 = vpop.permute.xlu0 %426
        %428 = vrot.lane.b32.xlu0 %v424, 95
        %v429 = vpop.permute.xlu0 %428
        %430 = vrot.lane.b32.xlu0 %v425, 95
        %v431 = vpop.permute.xlu0 %430
        %vm432 = vcmask 777216
        %v433 = vsel %vm432, %v427, %v429
        %v434 = vsel %vm432, %v429, %v431
        %vm437 = vcmask 1043456
        %v438 = vsel %vm437, %v270, %v386
        %v439 = vsel %vm437, %v271, %v387
        %v440 = vsel %vm437, %v294, %v392
        %v441 = vsel %vm437, %v295, %v393
        %v442 = vsel %vm437, %v409, %v415
        %v443 = vsel %vm437, %v410, %v416
        %v444 = vsel %vm437, %v351, %v433
        %v445 = vsel %vm437, %v352, %v434
        %v446 = vld [vmem:[%s1] sm:$0xff]
        %v447 = vld [vmem:[%s2] sm:$0xff]
        %449 = vset.pattern.permute.xlu0 0
        %450 = vperm.xlu0 %449, %v447
        %v451 = vpop.permute.xlu0 %450
        %vm453 = vcmask 293888
        %v455 = vsel %vm453, %v446, 0
        %v458 = vsel %vm437, %v370, 0
        %v461 = vsel %vm437, %v371, 0
        %463 = vmatpush.msra.mxu0 0.0
        %464 = vmatpush.msra.mxu0 0.0
        %465 = vmatpush.msra.mxu0 0.0
        %466 = vmatpush.msra.mxu0 0.0
        %467 = vmatpush.msra.mxu0 0.0
        %468 = vmatpush.msra.mxu0 0.0
        %469 = vmatpush.msra.mxu0 0.0
        %470 = vmatpush.msra.mxu0 0.0
        %471 = vmatpush.msra.mxu0 0.0
        %472 = vmatpush.msra.mxu0 0.0
        %473 = vmatpush.msra.mxu0 0.0
        %474 = vmatpush.msra.mxu0 %v458
        %475 = vmatpush.msra.mxu0 %v444
        %476 = vmatpush.msra.mxu0 %v442
        %477 = vmatpush.msra.mxu0 %v440
        %478 = vmatpush.msra.mxu0 %v438
        %479 = vmatmul.f32.gmra.mxu0 %v455
        %v480 = vpop.f32.mrf.mxu0
        %v481 = vadd.f32 %v451, %v480
        %482 = vdwg.mxu0
        %483 = vmatpush.msra.mxu0 0.0
        %484 = vmatpush.msra.mxu0 0.0
        %485 = vmatpush.msra.mxu0 0.0
        %486 = vmatpush.msra.mxu0 0.0
        %487 = vmatpush.msra.mxu0 0.0
        %488 = vmatpush.msra.mxu0 0.0
        %489 = vmatpush.msra.mxu0 0.0
        %490 = vmatpush.msra.mxu0 0.0
        %491 = vmatpush.msra.mxu0 0.0
        %492 = vmatpush.msra.mxu0 0.0
        %493 = vmatpush.msra.mxu0 0.0
        %494 = vmatpush.msra.mxu0 %v461
        %495 = vmatpush.msra.mxu0 %v445
        %496 = vmatpush.msra.mxu0 %v443
        %497 = vmatpush.msra.mxu0 %v441
        %498 = vmatpush.msra.mxu0 %v439
        %499 = vmatmul.f32.gmra.mxu0 %v455
        %v500 = vpop.f32.mrf.mxu0
        %v501 = vadd.f32 %v451, %v500
        %502 = vdwg.mxu0
        %503 = vst [vmem:[%s216] sm:$0xff] %v481
        %504 = vst [vmem:[%s216 + $0x8] sm:$0xff] %v501
        %v505 = vadd.f32 %v481, %v501
        %506 = vadd.xlane.f32.xlu0 %v505
        %v507 = vpop.xlane.xlu0 %506
        %v508 = vmul.f32 %v481, %v481
        %v509 = vmul.f32 %v501, %v501
        %v510 = vadd.f32 %v508, %v509
        %511 = vadd.xlane.f32.xlu0 %v510
        %v512 = vpop.xlane.xlu0 %511
        %vm513 = vcmask 7168
        %v514 = vsel %vm513, %v507, %v512
        %vm515 = vcmask 15360
        %516 = vst.msk [vmem:[%s226] sm:$0xff] %vm515, %v514
        %s517 = sand.u32 %s98, 1
        %s518 = scalar_lea.sflag [#allocation4], %s517
        %s519 = sand.u32 %s98, 1
        %s520 = smul.addr %s519, 16
        %s521 = scalar_lea.vmem [#allocation5], %s520
        %p522 = scmp.lt.s32.totalorder %s22, 1
        %s523 = scalar_select %p522, %s22, 1
        %s524 = smul.addr %s523, 8
        %s525 = scalar_lea.vmem %s4, %s524
        // Predicated region
        $region37: #{tpu_custom_call.1} parent=31 // pred_check
          %p526 = pneg %p108
        $region38: #{tpu_custom_call.1} parent=31 // pred_check_branch
          %528 = sbr.rel (%p526) target = $region40
        $region39: #{tpu_custom_call.1} parent=31 // pred_region
          %530 = vsyncadd %s518, 0
          %s531 = smul.addr %s22, 2
          %s532 = smul.addr %s531, 8
          %s533 = scalar_lea.hbm %s3, %s532
          %s535 = sshll.u32 %s521, 4
          %s536 = int_to_ptr.vmem [resolvable:$true] %s535
          %s537 = sshll.u32 %s533, 4
          %s538 = int_to_ptr.hbm [resolvable:$true] %s537
          %540 = dma.vmem_to_hbm [thread:$0]  %s536, 256, %s538, %s518
        $region40: #{tpu_custom_call.1} parent=31 // pred_fallthru
          _
        // Predicated region
        $region41: #{tpu_custom_call.1} parent=31 // pred_check
          %p541 = pneg %p134
        $region42: #{tpu_custom_call.1} parent=31 // pred_check_branch
          %543 = sbr.rel (%p541) target = $region44
        $region43: #{tpu_custom_call.1} parent=31 // pred_region
          _
        $region44: #{tpu_custom_call.1} parent=31 // pred_fallthru
          _
      $region32: #{tpu_custom_call.1} parent=5 // pred_fallthru
        _
      %p544 = scmp.le.s32.totalorder 2, %s17
      // Predicated region
      $region45: #{tpu_custom_call.1} parent=5 // pred_check
        %p545 = pneg %p544
      $region46: #{tpu_custom_call.1} parent=5 // pred_check_branch
        %547 = sbr.rel (%p545) target = $region48
      $region47: #{tpu_custom_call.1} parent=5 // pred_region
        %s548 = ssub.s32 %s17, 2
        // Predicated region
        $region49: #{tpu_custom_call.1} parent=47 // pred_check
          %p549 = pneg %p114
        $region50: #{tpu_custom_call.1} parent=47 // pred_check_branch
          %551 = sbr.rel (%p549) target = $region52
        $region51: #{tpu_custom_call.1} parent=47 // pred_region
          %s552 = sand.u32 %s99, 1
          %s553 = scalar_lea.sflag [#allocation4], %s552
          %s554 = sand.u32 %s99, 1
          %s555 = smul.addr %s554, 16
          %s556 = scalar_lea.vmem [#allocation5], %s555
          %558 = dma.done %s553, 256
        $region52: #{tpu_custom_call.1} parent=47 // pred_fallthru
          _
        // Predicated region
        $region53: #{tpu_custom_call.1} parent=47 // pred_check
          %p559 = pneg %p140
        $region54: #{tpu_custom_call.1} parent=47 // pred_check_branch
          %561 = sbr.rel (%p559) target = $region56
        $region55: #{tpu_custom_call.1} parent=47 // pred_region
          %p562 = scmp.lt.s32.totalorder %s23, 1
          %s563 = scalar_select %p562, %s23, 1
          %s564 = smul.addr %s563, 8
          %s565 = scalar_lea.vmem %s4, %s564
        $region56: #{tpu_custom_call.1} parent=47 // pred_fallthru
          _
      $region48: #{tpu_custom_call.1} parent=5 // pred_fallthru
        _
    $region6: #{tpu_custom_call.1} parent=1 // loop_footer
      %s21 = sadd.s32 1, %s17
    $region7: #{tpu_custom_call.1} parent=1 // loop_footer_branch
      %16 = sbr.rel target = $region3
    $region8: #{tpu_custom_call.1} parent=1 // loop_exit
      _
    %566 = vsyncpa [#allocation3], 1
    %s567 = scalar_lea.sflag [#allocation3], 1
    %568 = vsyncpa %s567, 1
    %569 = vsyncpa [#allocation4], 1
    %s570 = scalar_lea.sflag [#allocation4], 1
    %571 = vsyncpa %s570, 1

</llo_original>
